<compile_context>
chip_gen: v5e
topology: v5e:2x2
jax: 0.10.0
libtpu: 0.0.40
codegen_flags: <defaults>
</compile_context>

<pallas_src>
import functools

import jax
import jax.numpy as jnp
from jax.experimental import pallas as pl
from jax.experimental.pallas import tpu as pltpu


_LANE = 128
_ROW_ALIGN = 16          # sublane granularity safe for both f32 and bf16 blocks
_MAX_ROW_TILE = 1024


def _round_up(x, m):
    return ((x + m - 1) // m) * m


def _vmem_capacity_bytes():
    try:
        return int(pltpu.get_tpu_info().vmem_capacity_bytes)
    except Exception:
        return 64 * 1024 * 1024      # conservative (v7x-sized) fallback


def _pick_row_tile(n, c, itemsize, vmem_cap):
    # Budget ~1/4 of physical VMEM for the double-buffered logits blocks:
    #   2 (buffers) * tn * c_lanes * itemsize  <=  vmem_cap // 4
    c_lanes = _round_up(c, _LANE)    # Mosaic rounds the lane dim internally
    budget = max(4 * 1024 * 1024, vmem_cap // 4)
    tn = budget // (2 * c_lanes * max(1, itemsize))
    tn = (tn // _ROW_ALIGN) * _ROW_ALIGN
    tn = max(_ROW_ALIGN, min(_MAX_ROW_TILE, tn))
    return min(tn, _round_up(n, _ROW_ALIGN))


def _make_nll_kernel(beta, threshold, n_rows, row_tile):
    beta = float(beta)
    threshold = float(threshold)
    mask_edge_rows = (n_rows % row_tile) != 0

    def kernel(logits_ref, targets_ref, nll_ref):
        x = logits_ref[...].astype(jnp.float32)               # [TN, C]
        tn, c = x.shape

        # torch.nn.Softplus: (1/beta)*log1p(exp(beta*x)); linear when beta*x > threshold.
        bx = x if beta == 1.0 else beta * x
        sp_stable = jnp.log1p(jnp.exp(jnp.minimum(bx, threshold)))
        if beta != 1.0:
            sp_stable = sp_stable / beta
        sp = jnp.where(bx > threshold, x, sp_stable)           # [TN, C]

        row_sum = jnp.sum(sp, axis=1, keepdims=True)           # [TN, 1]
        # Gather sp[i, targets[i]] via compare + select + lane reduce.
        col = jax.lax.broadcasted_iota(jnp.int32, (tn, c), 1)
        sp_target = jnp.sum(jnp.where(col == targets_ref[...], sp, 0.0),
                            axis=1, keepdims=True)             # [TN, 1]

        # nll = -log(sp_target / row_sum)
        nll = jnp.log(row_sum) - jnp.log(sp_target)
        if mask_edge_rows:
            # Rows beyond N in the final (partial) block hold unspecified data;
            # keep them finite (their stores are masked anyway).
            row = (jax.lax.broadcasted_iota(jnp.int32, (tn, 1), 0)
                   + pl.program_id(0) * tn)
            nll = jnp.where(row < n_rows, nll, 0.0)
        nll_ref[...] = nll

    return kernel


@functools.partial(jax.jit, static_argnames=("beta", "threshold", "reduction"))
def softplus_cross_entropy_loss(logits, targets, *, beta=1.0, threshold=20.0,
                                reduction="mean"):
    """logits: [N, C] (any float dtype), targets: [N] int -> loss."""
    assert logits.ndim == 2 and targets.ndim == 1
    n, c = logits.shape
    red = reduction.lower()

    itemsize = jnp.dtype(logits.dtype).itemsize
    vmem_cap = _vmem_capacity_bytes()
    tn = _pick_row_tile(n, c, itemsize, vmem_cap)
    grid = (pl.cdiv(n, tn),)

    # Targets as an [N, 1] int32 column (tiny), logits straight from HBM untouched.
    targets_in = targets.astype(jnp.int32).reshape(n, 1)

    kernel = _make_nll_kernel(beta, threshold, n, tn)

    cost = pl.CostEstimate(
        flops=int(10 * n * c),
        transcendentals=int(2 * n * c + 2 * n),
        bytes_accessed=int(n * c * itemsize + 4 * n + 4 * n),
    )
    # Leave headroom below physical VMEM (v7x: 64 MiB; v5e/v6e: 128 MiB).
    vmem_limit = int(min(vmem_cap, 128 * 1024 * 1024) * 3 // 4)

    nll = pl.pallas_call(
        kernel,
        out_shape=jax.ShapeDtypeStruct((n, 1), jnp.float32),
        grid_spec=pltpu.PrefetchScalarGridSpec(
            num_scalar_prefetch=0,
            grid=grid,
            in_specs=[
                # Full class axis in one block (block dim == array dim is legal
                # even when C is not a multiple of 128).
                pl.BlockSpec((tn, c), lambda i: (i, 0)),
                pl.BlockSpec((tn, 1), lambda i: (i, 0)),
            ],
            out_specs=pl.BlockSpec((tn, 1), lambda i: (i, 0)),
        ),
        compiler_params=pltpu.CompilerParams(
            dimension_semantics=("parallel",),
            vmem_limit_bytes=vmem_limit,
        ),
        cost_estimate=cost,
    )(logits, targets_in)

    if red == "mean":
        return jnp.sum(nll[:, 0]) / n
    elif red == "sum":
        return jnp.sum(nll[:, 0])
    else:
        # reduction='none' -> per-sample NLL, shape [N, 1] like the PyTorch module.
        return nll


def _reference(logits, targets, beta=1.0, threshold=20.0):
    logits = logits.astype(jnp.float32)
    bx = beta * logits
    sp = jnp.where(bx > threshold, logits,
                   jnp.log1p(jnp.exp(jnp.minimum(bx, threshold))) / beta)
    p = sp / jnp.sum(sp, axis=1, keepdims=True)
    pt = jnp.take_along_axis(p, targets[:, None], axis=1)
    return jnp.mean(-jnp.log(pt))


if __name__ == "__main__":
    key = jax.random.PRNGKey(0)
    k_logits, k_targets = jax.random.split(key)

    # Deliberately unaligned shapes to exercise the partial-block (no-pad) path.
    N, C = 13, 40
    logits = jax.random.normal(k_logits, (N, C), dtype=jnp.float32) * 3.0
    targets = jax.random.randint(k_targets, (N,), 0, C, dtype=jnp.int32)

    # mean reduction (f32 input)
    loss = jax.block_until_ready(softplus_cross_entropy_loss(logits, targets))
    ref = _reference(logits, targets)
    assert jnp.allclose(loss, ref, rtol=1e-5, atol=1e-5), (loss, ref)

    # sum reduction
    loss_sum = jax.block_until_ready(
        softplus_cross_entropy_loss(logits, targets, reduction="sum"))
    assert jnp.allclose(loss_sum, ref * N, rtol=1e-4, atol=1e-4), (loss_sum, ref * N)

    # 'none' reduction -> per-sample NLL, shape [N, 1]
    nll_none = jax.block_until_ready(
        softplus_cross_entropy_loss(logits, targets, reduction="none"))
    assert nll_none.shape == (N, 1)
    assert jnp.allclose(jnp.mean(nll_none), ref, rtol=1e-5, atol=1e-5)

    # bf16 logits path: no f32 pre-cast in HBM, upcast happens inside the kernel.
    logits_bf16 = logits.astype(jnp.bfloat16)
    loss_bf16 = jax.block_until_ready(softplus_cross_entropy_loss(logits_bf16, targets))
    ref_bf16 = _reference(logits_bf16.astype(jnp.float32), targets)
    assert jnp.allclose(loss_bf16, ref_bf16, rtol=1e-4, atol=1e-4), (loss_bf16, ref_bf16)

    # Lane/sublane-aligned case (multi-row-tile friendly shape).
    N2, C2 = 64, 128
    logits2 = jax.random.normal(k_logits, (N2, C2), dtype=jnp.float32)
    targets2 = jax.random.randint(k_targets, (N2,), 0, C2, dtype=jnp.int32)
    loss2 = jax.block_until_ready(softplus_cross_entropy_loss(logits2, targets2))
    ref2 = _reference(logits2, targets2)
    assert jnp.allclose(loss2, ref2, rtol=1e-5, atol=1e-5), (loss2, ref2)

    print("KERNEL_OK")
</pallas_src>

<mosaic_0001>
module attributes {stable_mosaic.version = 11 : i64} {
  func.func @kernel(%arg0: i32, %arg1: memref<16x40xf32, #tpu.memory_space<vmem>>, %arg2: memref<16x1xi32, #tpu.memory_space<vmem>>, %arg3: memref<16x1xf32, #tpu.memory_space<vmem>>) attributes {dimension_semantics = [#tpu.dimension_semantics<parallel>], iteration_bounds = array<i64: 1>, scalar_prefetch = 0 : i64, scratch_operands = 0 : i64, tpu.core_type = #tpu.core_type<tc>, window_params = [{transform_indices = @transform_0, window_bounds = array<i64: 16, 40>}, {transform_indices = @transform_1, window_bounds = array<i64: 16, 1>}, {transform_indices = @transform_2, window_bounds = array<i64: 16, 1>}]} {
    %c0 = arith.constant 0 : index
    %c0_0 = arith.constant 0 : index
    %0 = vector.load %arg1[%c0, %c0_0] : memref<16x40xf32, #tpu.memory_space<vmem>>, vector<16x40xf32>
    %cst = arith.constant 2.000000e+01 : f32
    %1 = vector.broadcast %cst : f32 to vector<16x40xf32>
    %2 = arith.minimumf %0, %1 : vector<16x40xf32>
    %3 = math.exp %2 : vector<16x40xf32>
    %4 = math.log1p %3 : vector<16x40xf32>
    %cst_1 = arith.constant 2.000000e+01 : f32
    %5 = vector.broadcast %cst_1 : f32 to vector<16x40xf32>
    %6 = arith.cmpf ogt, %0, %5 : vector<16x40xf32>
    %7 = arith.select %6, %0, %4 : vector<16x40xi1>, vector<16x40xf32>
    %cst_2 = arith.constant dense<0.000000e+00> : vector<16xf32>
    %8 = vector.multi_reduction <add>, %7, %cst_2 [1] : vector<16x40xf32> to vector<16xf32>
    %9 = vector.shape_cast %8 : vector<16xf32> to vector<16x1xf32>
    %10 = tpu.iota {dimensions = array<i32: 1>} : vector<16x40xi32>
    %c0_3 = arith.constant 0 : index
    %c0_4 = arith.constant 0 : index
    %11 = vector.load %arg2[%c0_3, %c0_4] : memref<16x1xi32, #tpu.memory_space<vmem>>, vector<16x1xi32>
    %12 = vector.broadcast %11 : vector<16x1xi32> to vector<16x40xi32>
    %13 = arith.cmpi eq, %10, %12 : vector<16x40xi32>
    %cst_5 = arith.constant 0.000000e+00 : f32
    %14 = vector.broadcast %cst_5 : f32 to vector<16x40xf32>
    %15 = arith.select %13, %7, %14 : vector<16x40xi1>, vector<16x40xf32>
    %cst_6 = arith.constant dense<0.000000e+00> : vector<16xf32>
    %16 = vector.multi_reduction <add>, %15, %cst_6 [1] : vector<16x40xf32> to vector<16xf32>
    %17 = vector.shape_cast %16 : vector<16xf32> to vector<16x1xf32>
    %18 = math.log %9 : vector<16x1xf32>
    %19 = math.log %17 : vector<16x1xf32>
    %20 = arith.subf %18, %19 : vector<16x1xf32>
    %21 = tpu.iota {dimensions = array<i32: 0>} : vector<16x1xi32>
    %c16_i32 = arith.constant 16 : i32
    %22 = arith.muli %arg0, %c16_i32 : i32
    %23 = vector.broadcast %22 : i32 to vector<16x1xi32>
    %24 = arith.addi %21, %23 : vector<16x1xi32>
    %c13_i32 = arith.constant 13 : i32
    %25 = vector.broadcast %c13_i32 : i32 to vector<16x1xi32>
    %26 = arith.cmpi slt, %24, %25 : vector<16x1xi32>
    %cst_7 = arith.constant 0.000000e+00 : f32
    %27 = vector.broadcast %cst_7 : f32 to vector<16x1xf32>
    %28 = arith.select %26, %20, %27 : vector<16x1xi1>, vector<16x1xf32>
    %c0_8 = arith.constant 0 : index
    %c0_9 = arith.constant 0 : index
    %29 = vector.load %arg3[%c0_8, %c0_9] : memref<16x1xf32, #tpu.memory_space<vmem>>, vector<16x1xf32>
    tpu.vector_store %arg3[%c0_8, %c0_9], %28 {strides = array<i32>} : memref<16x1xf32, #tpu.memory_space<vmem>>, vector<16x1xf32>,
    return
  }
  func.func @transform_0(%arg0: i32) -> (i32, i32) {
    %c0_i32 = arith.constant 0 : i32
    %c0_i32_0 = arith.constant 0 : i32
    return %arg0, %c0_i32 : i32, i32
  }
  func.func @transform_1(%arg0: i32) -> (i32, i32) {
    %c0_i32 = arith.constant 0 : i32
    %c0_i32_0 = arith.constant 0 : i32
    return %arg0, %c0_i32 : i32, i32
  }
  func.func @transform_2(%arg0: i32) -> (i32, i32) {
    %c0_i32 = arith.constant 0 : i32
    %c0_i32_0 = arith.constant 0 : i32
    return %arg0, %c0_i32 : i32, i32
  }
}

</mosaic_0001>

<llo_original>
// kernel: softplus_cross_entropy_loss.1
$region0: #{softplus_cross_entropy_loss.1}
  #allocation0 [shape = 'u32[]', space=smem, size = 0x4, offset = 0x4, fixed_abs, tag = 'smem constant byte address 0x4 - core index']
  #allocation1 [shape = 'u32[72,128]{1,0:T(1,128)}', space=vmem, size = 0x9000, scoped, tag = 'internal scratch']
  %s0 = inlined_call_operand.vmem [shape: f32[13,40], index: 0, kind: input, shape index: {}]
  %s1 = inlined_call_operand.vmem [shape: s32[13,1], index: 1, kind: input, shape index: {}]
  %s2 = inlined_call_operand.vmem [shape: f32[13,1], index: 2, kind: output, shape index: {}]
  %s3 = sld [smem:[#allocation0]]
  $region18: #{softplus_cross_entropy_loss.1} parent=0
    _
  %s5 = ssub.s32 1, %s3
  %s6 = scalar_select 0, %s5, %s3
  // Predicated region
  $region2: #{softplus_cross_entropy_loss.1} parent=0 // pred_check
    _
  $region3: #{softplus_cross_entropy_loss.1} parent=0 // pred_check_branch
    %8 = sbr.rel (0) target = $region5
  $region4: #{softplus_cross_entropy_loss.1} parent=0 // pred_region
    _
  $region5: #{softplus_cross_entropy_loss.1} parent=0 // pred_fallthru
    _
  // Predicated region
  $region6: #{softplus_cross_entropy_loss.1} parent=0 // pred_check
    _
  $region7: #{softplus_cross_entropy_loss.1} parent=0 // pred_check_branch
    %10 = sbr.rel (0) target = $region9
  $region8: #{softplus_cross_entropy_loss.1} parent=0 // pred_region
    _
  $region9: #{softplus_cross_entropy_loss.1} parent=0 // pred_fallthru
    _
  %v11 = vld [vmem:[%s0] sm:$0xff]
  %v12 = vld [vmem:[%s0 + $0x8] sm:$0xff]
  %v13 = vmin.f32 %v11, 20.0
  %v14 = vmin.f32 %v12, 20.0
  %v15 = vmul.f32 %v13, 1.442695
  %v16 = vpow.pop %v15
  %v17 = vmul.f32 %v14, 1.442695
  %v18 = vpow.pop %v17
  %v19 = vadd.f32 %v16, 1.0
  %v20 = vlog2.pop %v19
  %v21 = vmul.f32 %v20, 0.6931472
  %v22 = vmul.f32 -0.5, %v16
  %v23 = vadd.f32 %v22, 1.0
  %v24 = vmul.f32 %v23, %v16
  %v25 = vand.u32 2147483647, %v16
  %vm26 = vcmp.lt.f32.partialorder %v25, 0.0004427343
  %v27 = vsel %vm26, %v24, %v21
  %v28 = vadd.f32 %v18, 1.0
  %v29 = vlog2.pop %v28
  %v30 = vmul.f32 %v29, 0.6931472
  %v31 = vmul.f32 -0.5, %v18
  %v32 = vadd.f32 %v31, 1.0
  %v33 = vmul.f32 %v32, %v18
  %v34 = vand.u32 2147483647, %v18
  %vm35 = vcmp.lt.f32.partialorder %v34, 0.0004427343
  %v36 = vsel %vm35, %v33, %v30
  %vm37 = vcmp.gt.f32.partialorder %v11, 20.0
  %vm38 = vcmp.gt.f32.partialorder %v12, 20.0
  %v39 = vsel %vm37, %v11, %v27
  %v40 = vsel %vm38, %v12, %v36
  %vm41 = vcmask 326656
  %v42 = vsel %vm41, %v39, 0.0
  %43 = vadd.xlane.f32.xlu0 %v42
  %v44 = vpop.xlane.xlu0 %43
  %v45 = vsel %vm41, %v40, 0.0
  %46 = vadd.xlane.f32.xlu0 %v45
  %v47 = vpop.xlane.xlu0 %46
  %v48 = vlaneseq
  %v49 = vand.u32 %v48, 127
  %v50 = vld [vmem:[%s1] sm:$0xff]
  %v51 = vld [vmem:[%s1 + $0x8] sm:$0xff]
  %52 = vset.pattern.permute.xlu0 0
  %53 = vperm.xlu0 %52, %v50
  %v54 = vpop.permute.xlu0 %53
  %55 = vset.pattern.permute.xlu0 0
  %56 = vperm.xlu0 %55, %v51
  %v57 = vpop.permute.xlu0 %56
  %vm58 = vcmp.eq.s32.totalorder %v49, %v54
  %vm59 = vcmp.eq.s32.totalorder %v49, %v57
  %v60 = vsel %vm58, %v39, 0.0
  %v61 = vsel %vm59, %v40, 0.0
  %v62 = vsel %vm41, %v60, 0.0
  %63 = vadd.xlane.f32.xlu0 %v62
  %v64 = vpop.xlane.xlu0 %63
  %v65 = vsel %vm41, %v61, 0.0
  %66 = vadd.xlane.f32.xlu0 %v65
  %v67 = vpop.xlane.xlu0 %66
  %v68 = vlog2.pop %v44
  %v69 = vmul.f32 %v68, 0.6931472
  %v70 = vlog2.pop %v47
  %v71 = vmul.f32 %v70, 0.6931472
  %v72 = vlog2.pop %v64
  %v73 = vmul.f32 %v72, 0.6931472
  %v74 = vlog2.pop %v67
  %v75 = vmul.f32 %v74, 0.6931472
  %v76 = vsub.f32 %v69, %v73
  %v77 = vsub.f32 %v71, %v75
  %v78 = vlaneseq
  %v79 = vshrl.u32 %v78, 7
  %v80 = vadd.s32 %v79, 8
  %s81 = smul.u32 0, 16
  %v82 = vstv %s81
  %v83 = vadd.s32 %v79, %v82
  %v84 = vadd.s32 %v80, %v82
  %vm85 = vcmp.lt.s32.totalorder %v83, 13
  %vm86 = vcmp.lt.s32.totalorder %v84, 13
  %v87 = vsel %vm85, %v76, 0.0
  %v88 = vsel %vm86, %v77, 0.0
  %vm89 = vcmask 7168
  %90 = vst.msk [vmem:[%s2] sm:$0xff] %vm89, %v87
  %91 = vst.msk [vmem:[%s2 + $0x8] sm:$0xff] %vm89, %v88
  // Predicated region
  $region10: #{softplus_cross_entropy_loss.1} parent=0 // pred_check
    _
  $region11: #{softplus_cross_entropy_loss.1} parent=0 // pred_check_branch
    %93 = sbr.rel (0) target = $region13
  $region12: #{softplus_cross_entropy_loss.1} parent=0 // pred_region
    _
  $region13: #{softplus_cross_entropy_loss.1} parent=0 // pred_fallthru
    _
  // Predicated region
  $region14: #{softplus_cross_entropy_loss.1} parent=0 // pred_check
    _
  $region15: #{softplus_cross_entropy_loss.1} parent=0 // pred_check_branch
    %95 = sbr.rel (0) target = $region17
  $region16: #{softplus_cross_entropy_loss.1} parent=0 // pred_region
    _
  $region17: #{softplus_cross_entropy_loss.1} parent=0 // pred_fallthru
    _

</llo_original>
